<compile_context>
chip_gen: v7x
topology: tpu7x:2x2x1
jax: 0.10.0
libtpu: 0.0.40
codegen_flags: <defaults>
</compile_context>

<pallas_src>
import functools

import jax
import jax.numpy as jnp
import numpy as np
from jax.experimental import pallas as pl
from jax.experimental.pallas import tpu as pltpu


def _mmkl_kernel(mu_i_ref, sg_i_ref, mu_t_ref, sg_t_ref, mu_j_ref, sg_j_ref,
                 out_ref, acc_ref, *, steps_per_core, block_rows, valid_rows):
    c = pl.program_id(0)          # core-parallel axis
    s = pl.program_id(1)          # sequential reduction axis (accumulator-resident)

    @pl.when(s == 0)
    def _init():
        acc_ref[...] = jnp.zeros_like(acc_ref)

    mu_i = mu_i_ref[...].astype(jnp.float32)
    sg_i = sg_i_ref[...].astype(jnp.float32)
    mu_t = mu_t_ref[...].astype(jnp.float32)
    sg_t = sg_t_ref[...].astype(jnp.float32)
    mu_j = mu_j_ref[...].astype(jnp.float32)
    sg_j = sg_j_ref[...].astype(jnp.float32)

    # Log terms of the three KL's cancel to 2*(log sg_j - log sg_i): 2 EUP logs.
    log_term = 2.0 * (jnp.log(sg_j) - jnp.log(sg_i))

    var_i = sg_i * sg_i
    var_t = sg_t * sg_t
    var_j = sg_j * sg_j

    # EUP approx reciprocal + one Newton-Raphson refinement (~f32 accurate),
    # instead of VALU divides.
    r_t = pl.reciprocal(var_t, approx=True)
    r_t = r_t * (2.0 - var_t * r_t)
    r_j = pl.reciprocal(var_j, approx=True)
    r_j = r_j * (2.0 - var_j * r_j)

    d_it = mu_i - mu_t
    d_ij = mu_i - mu_j
    d_tj = mu_t - mu_j

    # Sum of the three pairwise KL's, elementwise (the three -0.5 folded to -1.5).
    kl_all = (log_term
              + (var_i + d_it * d_it) * (0.5 * r_t)
              + (var_i + var_t + d_ij * d_ij + d_tj * d_tj) * (0.5 * r_j)
              - 1.5)

    # Mask rows beyond the true row count (partial tail block padding and the
    # clamped duplicate blocks of the last core) BEFORE the reduction, so any
    # NaN/Inf produced from unspecified padding values cannot reach the sum.
    base = (c * steps_per_core + s) * block_rows
    row = base + jax.lax.broadcasted_iota(jnp.int32, kl_all.shape, 0)
    kl_all = jnp.where(row < valid_rows, kl_all, 0.0)

    # Elementwise vector accumulation (pure VPU); no per-step cross-lane reduce.
    acc_ref[...] = acc_ref[...] + kl_all

    @pl.when(s == steps_per_core - 1)
    def _finalize():
        total = jnp.sum(acc_ref[...])            # one-time XLU reduce per core
        r_idx = jax.lax.broadcasted_iota(jnp.int32, out_ref.shape, 0)
        c_idx = jax.lax.broadcasted_iota(jnp.int32, out_ref.shape, 1)
        # Per-core partial sum lands at [0, 0] of this core's (8, 128) block.
        out_ref[...] = jnp.where((r_idx == 0) & (c_idx == 0), total, 0.0)


def _pick_block_rows(rows, cols, target_bytes=1 << 20):
    """~1 MiB per pipelined input buffer; multiple of 8 sublanes."""
    if rows <= 8:
        return rows                               # block == full dim is always legal
    br = min(rows, max(8, target_bytes // (cols * 4)))
    return max(8, (br // 8) * 8)


def mmkl_loss(mu_i, sg_i, mu_t, sg_t, mu_j, sg_j, *, block_rows=None, num_cores=2):
    """MMKLLoss.forward for three diagonal Normals given as (loc, scale) pairs."""
    n, l = mu_i.shape
    t = n * l

    # Lane-dense relayout only when it is a pure row-major reshape (no pad copy).
    shape2d = (t // 128, 128) if t % 128 == 0 else (n, l)
    rows, cols = shape2d
    planes = [x.reshape(shape2d) for x in (mu_i, sg_i, mu_t, sg_t, mu_j, sg_j)]

    br = _pick_block_rows(rows, cols) if block_rows is None else block_rows
    br = rows if rows <= 8 else max(8, (min(br, rows) // 8) * 8)

    total_blocks = pl.cdiv(rows, br)
    nc = num_cores if total_blocks >= num_cores else 1
    steps = pl.cdiv(total_blocks, nc)

    def in_index(c, s):
        # Clamp so the last core's surplus steps stay in range; their logical
        # rows are >= `rows`, so the in-kernel mask zeroes their contribution.
        return (jnp.minimum(c * steps + s, total_blocks - 1), 0)

    in_spec = pl.BlockSpec((br, cols), in_index)
    out_spec = pl.BlockSpec((8, 128), lambda c, s: (c, 0))

    kernel = functools.partial(_mmkl_kernel, steps_per_core=steps,
                               block_rows=br, valid_rows=rows)

    partials = pl.pallas_call(
        kernel,
        out_shape=jax.ShapeDtypeStruct((nc * 8, 128), jnp.float32),
        grid_spec=pltpu.PrefetchScalarGridSpec(
            num_scalar_prefetch=0,
            grid=(nc, steps),
            in_specs=[in_spec] * 6,
            out_specs=out_spec,
            scratch_shapes=[pltpu.VMEM((br, cols), jnp.float32)],
        ),
        compiler_params=pltpu.CompilerParams(
            dimension_semantics=("parallel", "arbitrary"),
            vmem_limit_bytes=32 * 1024 * 1024,
        ),
    )(*planes)

    # Only [c*8, 0] of each per-core block is non-zero; tiny wrapper-side reduce.
    return jnp.sum(partials) / (3.0 * n)


def reference_mmkl(mu_i, sg_i, mu_t, sg_t, mu_j, sg_j):
    """Pure-NumPy (float64) replication of the PyTorch forward."""
    mu_i, sg_i, mu_t, sg_t, mu_j, sg_j = (
        np.asarray(x, dtype=np.float64) for x in (mu_i, sg_i, mu_t, sg_t, mu_j, sg_j))

    def kl(mp, sp, mq, sq):
        return (np.log(sq) - np.log(sp)
                + (sp ** 2 + (mp - mq) ** 2) / (2.0 * sq ** 2) - 0.5)

    kl_it = kl(mu_i, sg_i, mu_t, sg_t).sum(1).mean()
    kl_ij = kl(mu_i, sg_i, mu_j, sg_j).sum(1).mean()
    kl_tj = kl(mu_t, sg_t, mu_j, sg_j).sum(1).mean()
    return float((kl_it + kl_ij + kl_tj) / 3.0)


def _make_inputs(key, n, l):
    keys = jax.random.split(key, 6)
    mu_i = jax.random.normal(keys[0], (n, l), jnp.float32)
    mu_t = jax.random.normal(keys[1], (n, l), jnp.float32)
    mu_j = jax.random.normal(keys[2], (n, l), jnp.float32)
    sg_i = jax.nn.softplus(jax.random.normal(keys[3], (n, l), jnp.float32)) + 0.1
    sg_t = jax.nn.softplus(jax.random.normal(keys[4], (n, l), jnp.float32)) + 0.1
    sg_j = jax.nn.softplus(jax.random.normal(keys[5], (n, l), jnp.float32)) + 0.1
    return mu_i, sg_i, mu_t, sg_t, mu_j, sg_j


if __name__ == "__main__":
    key = jax.random.PRNGKey(0)

    # (N, L, block_rows override) — covers: lane-dense reshape single block;
    # multi-block 2-core partial sums; ragged (N,L) fallback with padded tail.
    cases = [
        (16, 16, None),   # N*L = 256 -> (2, 128) lane-dense plane, one block
        (256, 16, 8),     # (32, 128) planes, 4 blocks split over 2 "cores"
        (37, 12, None),   # N*L % 128 != 0 -> (37, 12) fallback, masked tail rows
    ]
    for n, l, br in cases:
        key, sub = jax.random.split(key)
        args = _make_inputs(sub, n, l)
        loss = mmkl_loss(*args, block_rows=br)
        loss = jax.block_until_ready(loss)
        ref = reference_mmkl(*args)
        np.testing.assert_allclose(float(loss), ref, rtol=1e-4, atol=1e-4)

    print("KERNEL_OK")
</pallas_src>

<mosaic_0001>
module attributes {stable_mosaic.version = 11 : i64} {
  func.func @_mmkl_kernel(%arg0: i32, %arg1: i32, %arg2: memref<2x128xf32, #tpu.memory_space<vmem>>, %arg3: memref<2x128xf32, #tpu.memory_space<vmem>>, %arg4: memref<2x128xf32, #tpu.memory_space<vmem>>, %arg5: memref<2x128xf32, #tpu.memory_space<vmem>>, %arg6: memref<2x128xf32, #tpu.memory_space<vmem>>, %arg7: memref<2x128xf32, #tpu.memory_space<vmem>>, %arg8: memref<8x128xf32, #tpu.memory_space<vmem>>, %arg9: memref<2x128xf32, #tpu.memory_space<vmem>>) attributes {dimension_semantics = [#tpu.dimension_semantics<parallel>, #tpu.dimension_semantics<arbitrary>], iteration_bounds = array<i64: 1, 1>, scalar_prefetch = 0 : i64, scratch_operands = 1 : i64, tpu.core_type = #tpu.core_type<tc>, window_params = [{transform_indices = @transform_0, window_bounds = array<i64: 2, 128>}, {transform_indices = @transform_1, window_bounds = array<i64: 2, 128>}, {transform_indices = @transform_2, window_bounds = array<i64: 2, 128>}, {transform_indices = @transform_3, window_bounds = array<i64: 2, 128>}, {transform_indices = @transform_4, window_bounds = array<i64: 2, 128>}, {transform_indices = @transform_5, window_bounds = array<i64: 2, 128>}, {transform_indices = @transform_6, window_bounds = array<i64: 8, 128>}]} {
    %c0_i32 = arith.constant 0 : i32
    %0 = arith.cmpi eq, %arg1, %c0_i32 : i32
    %1 = arith.extui %0 : i1 to i32
    %c0_i32_0 = arith.constant 0 : i32
    %2 = arith.cmpi ne, %1, %c0_i32_0 : i32
    scf.if %2 {
      %cst_25 = arith.constant 0.000000e+00 : f32
      %63 = vector.broadcast %cst_25 : f32 to vector<2x128xf32>
      %c0_26 = arith.constant 0 : index
      %c0_27 = arith.constant 0 : index
      %64 = vector.load %arg9[%c0_26, %c0_27] : memref<2x128xf32, #tpu.memory_space<vmem>>, vector<2x128xf32>
      tpu.vector_store %arg9[%c0_26, %c0_27], %63 {strides = array<i32>} : memref<2x128xf32, #tpu.memory_space<vmem>>, vector<2x128xf32>,
    } else {
    }
    %c0 = arith.constant 0 : index
    %c0_1 = arith.constant 0 : index
    %3 = vector.load %arg2[%c0, %c0_1] : memref<2x128xf32, #tpu.memory_space<vmem>>, vector<2x128xf32>
    %c0_2 = arith.constant 0 : index
    %c0_3 = arith.constant 0 : index
    %4 = vector.load %arg3[%c0_2, %c0_3] : memref<2x128xf32, #tpu.memory_space<vmem>>, vector<2x128xf32>
    %c0_4 = arith.constant 0 : index
    %c0_5 = arith.constant 0 : index
    %5 = vector.load %arg4[%c0_4, %c0_5] : memref<2x128xf32, #tpu.memory_space<vmem>>, vector<2x128xf32>
    %c0_6 = arith.constant 0 : index
    %c0_7 = arith.constant 0 : index
    %6 = vector.load %arg5[%c0_6, %c0_7] : memref<2x128xf32, #tpu.memory_space<vmem>>, vector<2x128xf32>
    %c0_8 = arith.constant 0 : index
    %c0_9 = arith.constant 0 : index
    %7 = vector.load %arg6[%c0_8, %c0_9] : memref<2x128xf32, #tpu.memory_space<vmem>>, vector<2x128xf32>
    %c0_10 = arith.constant 0 : index
    %c0_11 = arith.constant 0 : index
    %8 = vector.load %arg7[%c0_10, %c0_11] : memref<2x128xf32, #tpu.memory_space<vmem>>, vector<2x128xf32>
    %9 = math.log %8 : vector<2x128xf32>
    %10 = math.log %4 : vector<2x128xf32>
    %11 = arith.subf %9, %10 : vector<2x128xf32>
    %cst = arith.constant 2.000000e+00 : f32
    %12 = vector.broadcast %cst : f32 to vector<2x128xf32>
    %13 = arith.mulf %12, %11 : vector<2x128xf32>
    %14 = arith.mulf %4, %4 : vector<2x128xf32>
    %15 = arith.mulf %6, %6 : vector<2x128xf32>
    %16 = arith.mulf %8, %8 : vector<2x128xf32>
    %17 = tpu.reciprocal %15 {approx = true} : vector<2x128xf32> -> vector<2x128xf32>
    %18 = arith.mulf %15, %17 : vector<2x128xf32>
    %cst_12 = arith.constant 2.000000e+00 : f32
    %19 = vector.broadcast %cst_12 : f32 to vector<2x128xf32>
    %20 = arith.subf %19, %18 : vector<2x128xf32>
    %21 = arith.mulf %17, %20 : vector<2x128xf32>
    %22 = tpu.reciprocal %16 {approx = true} : vector<2x128xf32> -> vector<2x128xf32>
    %23 = arith.mulf %16, %22 : vector<2x128xf32>
    %cst_13 = arith.constant 2.000000e+00 : f32
    %24 = vector.broadcast %cst_13 : f32 to vector<2x128xf32>
    %25 = arith.subf %24, %23 : vector<2x128xf32>
    %26 = arith.mulf %22, %25 : vector<2x128xf32>
    %27 = arith.subf %3, %5 : vector<2x128xf32>
    %28 = arith.subf %3, %7 : vector<2x128xf32>
    %29 = arith.subf %5, %7 : vector<2x128xf32>
    %30 = arith.mulf %27, %27 : vector<2x128xf32>
    %31 = arith.addf %14, %30 : vector<2x128xf32>
    %cst_14 = arith.constant 5.000000e-01 : f32
    %32 = vector.broadcast %cst_14 : f32 to vector<2x128xf32>
    %33 = arith.mulf %32, %21 : vector<2x128xf32>
    %34 = arith.mulf %31, %33 : vector<2x128xf32>
    %35 = arith.addf %13, %34 : vector<2x128xf32>
    %36 = arith.addf %14, %15 : vector<2x128xf32>
    %37 = arith.mulf %28, %28 : vector<2x128xf32>
    %38 = arith.addf %36, %37 : vector<2x128xf32>
    %39 = arith.mulf %29, %29 : vector<2x128xf32>
    %40 = arith.addf %38, %39 : vector<2x128xf32>
    %cst_15 = arith.constant 5.000000e-01 : f32
    %41 = vector.broadcast %cst_15 : f32 to vector<2x128xf32>
    %42 = arith.mulf %41, %26 : vector<2x128xf32>
    %43 = arith.mulf %40, %42 : vector<2x128xf32>
    %44 = arith.addf %35, %43 : vector<2x128xf32>
    %cst_16 = arith.constant 1.500000e+00 : f32
    %45 = vector.broadcast %cst_16 : f32 to vector<2x128xf32>
    %46 = arith.subf %44, %45 : vector<2x128xf32>
    %c1_i32 = arith.constant 1 : i32
    %47 = arith.muli %arg0, %c1_i32 : i32
    %48 = arith.addi %47, %arg1 : i32
    %c2_i32 = arith.constant 2 : i32
    %49 = arith.muli %48, %c2_i32 : i32
    %50 = tpu.iota {dimensions = array<i32: 0>} : vector<2x128xi32>
    %51 = vector.broadcast %49 : i32 to vector<2x128xi32>
    %52 = arith.addi %51, %50 : vector<2x128xi32>
    %c2_i32_17 = arith.constant 2 : i32
    %53 = vector.broadcast %c2_i32_17 : i32 to vector<2x128xi32>
    %54 = arith.cmpi slt, %52, %53 : vector<2x128xi32>
    %cst_18 = arith.constant 0.000000e+00 : f32
    %55 = vector.broadcast %cst_18 : f32 to vector<2x128xf32>
    %56 = arith.select %54, %46, %55 : vector<2x128xi1>, vector<2x128xf32>
    %c0_19 = arith.constant 0 : index
    %c0_20 = arith.constant 0 : index
    %57 = vector.load %arg9[%c0_19, %c0_20] : memref<2x128xf32, #tpu.memory_space<vmem>>, vector<2x128xf32>
    %58 = arith.addf %57, %56 : vector<2x128xf32>
    %c0_21 = arith.constant 0 : index
    %c0_22 = arith.constant 0 : index
    %59 = vector.load %arg9[%c0_21, %c0_22] : memref<2x128xf32, #tpu.memory_space<vmem>>, vector<2x128xf32>
    tpu.vector_store %arg9[%c0_21, %c0_22], %58 {strides = array<i32>} : memref<2x128xf32, #tpu.memory_space<vmem>>, vector<2x128xf32>,
    %c0_i32_23 = arith.constant 0 : i32
    %60 = arith.cmpi eq, %arg1, %c0_i32_23 : i32
    %61 = arith.extui %60 : i1 to i32
    %c0_i32_24 = arith.constant 0 : i32
    %62 = arith.cmpi ne, %61, %c0_i32_24 : i32
    scf.if %62 {
      %c0_25 = arith.constant 0 : index
      %c0_26 = arith.constant 0 : index
      %63 = vector.load %arg9[%c0_25, %c0_26] : memref<2x128xf32, #tpu.memory_space<vmem>>, vector<2x128xf32>
      %64 = vector.shape_cast %63 : vector<2x128xf32> to vector<1x2x128xf32>
      %cst_27 = arith.constant dense<0.000000e+00> : vector<1xf32>
      %65 = vector.multi_reduction <add>, %64, %cst_27 [1, 2] : vector<1x2x128xf32> to vector<1xf32>
      %66 = vector.shape_cast %65 : vector<1xf32> to vector<1x1x1xf32>
      %67 = vector.extract %66[0, 0, 0] : f32 from vector<1x1x1xf32>
      %68 = tpu.iota {dimensions = array<i32: 0>} : vector<8x128xi32>
      %69 = tpu.iota {dimensions = array<i32: 1>} : vector<8x128xi32>
      %c0_i32_28 = arith.constant 0 : i32
      %70 = vector.broadcast %c0_i32_28 : i32 to vector<8x128xi32>
      %71 = arith.cmpi eq, %68, %70 : vector<8x128xi32>
      %c0_i32_29 = arith.constant 0 : i32
      %72 = vector.broadcast %c0_i32_29 : i32 to vector<8x128xi32>
      %73 = arith.cmpi eq, %69, %72 : vector<8x128xi32>
      %74 = arith.andi %71, %73 : vector<8x128xi1>
      %cst_30 = arith.constant 0.000000e+00 : f32
      %75 = vector.broadcast %67 : f32 to vector<8x128xf32>
      %76 = vector.broadcast %cst_30 : f32 to vector<8x128xf32>
      %77 = arith.select %74, %75, %76 : vector<8x128xi1>, vector<8x128xf32>
      %c0_31 = arith.constant 0 : index
      %c0_32 = arith.constant 0 : index
      %78 = vector.load %arg8[%c0_31, %c0_32] : memref<8x128xf32, #tpu.memory_space<vmem>>, vector<8x128xf32>
      tpu.vector_store %arg8[%c0_31, %c0_32], %77 {strides = array<i32>} : memref<8x128xf32, #tpu.memory_space<vmem>>, vector<8x128xf32>,
    } else {
    }
    return
  }
  func.func @transform_0(%arg0: i32, %arg1: i32) -> (i32, i32) {
    %c1_i32 = arith.constant 1 : i32
    %0 = arith.muli %arg0, %c1_i32 : i32
    %1 = arith.addi %0, %arg1 : i32
    %c0_i32 = arith.constant 0 : i32
    %2 = arith.minsi %1, %c0_i32 : i32
    %c0_i32_0 = arith.constant 0 : i32
    %c0_i32_1 = arith.constant 0 : i32
    return %2, %c0_i32_0 : i32, i32
  }
  func.func @transform_1(%arg0: i32, %arg1: i32) -> (i32, i32) {
    %c1_i32 = arith.constant 1 : i32
    %0 = arith.muli %arg0, %c1_i32 : i32
    %1 = arith.addi %0, %arg1 : i32
    %c0_i32 = arith.constant 0 : i32
    %2 = arith.minsi %1, %c0_i32 : i32
    %c0_i32_0 = arith.constant 0 : i32
    %c0_i32_1 = arith.constant 0 : i32
    return %2, %c0_i32_0 : i32, i32
  }
  func.func @transform_2(%arg0: i32, %arg1: i32) -> (i32, i32) {
    %c1_i32 = arith.constant 1 : i32
    %0 = arith.muli %arg0, %c1_i32 : i32
    %1 = arith.addi %0, %arg1 : i32
    %c0_i32 = arith.constant 0 : i32
    %2 = arith.minsi %1, %c0_i32 : i32
    %c0_i32_0 = arith.constant 0 : i32
    %c0_i32_1 = arith.constant 0 : i32
    return %2, %c0_i32_0 : i32, i32
  }
  func.func @transform_3(%arg0: i32, %arg1: i32) -> (i32, i32) {
    %c1_i32 = arith.constant 1 : i32
    %0 = arith.muli %arg0, %c1_i32 : i32
    %1 = arith.addi %0, %arg1 : i32
    %c0_i32 = arith.constant 0 : i32
    %2 = arith.minsi %1, %c0_i32 : i32
    %c0_i32_0 = arith.constant 0 : i32
    %c0_i32_1 = arith.constant 0 : i32
    return %2, %c0_i32_0 : i32, i32
  }
  func.func @transform_4(%arg0: i32, %arg1: i32) -> (i32, i32) {
    %c1_i32 = arith.constant 1 : i32
    %0 = arith.muli %arg0, %c1_i32 : i32
    %1 = arith.addi %0, %arg1 : i32
    %c0_i32 = arith.constant 0 : i32
    %2 = arith.minsi %1, %c0_i32 : i32
    %c0_i32_0 = arith.constant 0 : i32
    %c0_i32_1 = arith.constant 0 : i32
    return %2, %c0_i32_0 : i32, i32
  }
  func.func @transform_5(%arg0: i32, %arg1: i32) -> (i32, i32) {
    %c1_i32 = arith.constant 1 : i32
    %0 = arith.muli %arg0, %c1_i32 : i32
    %1 = arith.addi %0, %arg1 : i32
    %c0_i32 = arith.constant 0 : i32
    %2 = arith.minsi %1, %c0_i32 : i32
    %c0_i32_0 = arith.constant 0 : i32
    %c0_i32_1 = arith.constant 0 : i32
    return %2, %c0_i32_0 : i32, i32
  }
  func.func @transform_6(%arg0: i32, %arg1: i32) -> (i32, i32) {
    %c0_i32 = arith.constant 0 : i32
    %c0_i32_0 = arith.constant 0 : i32
    return %arg0, %c0_i32 : i32, i32
  }
}

</mosaic_0001>

<llo_original>
// kernel: tpu_custom_call.1
$region0: #{tpu_custom_call.1}
  #allocation0 [shape = 'u32[]', space=smem, size = 0x4, offset = 0x4, fixed_abs, tag = 'smem constant byte address 0x4 - core index']
  #allocation1 [shape = 'u32[144,128]{1,0:T(1,128)}', space=vmem, size = 0x12000, scoped, tag = 'internal scratch']
  #allocation2 [shape = 'f32[2,128]{1,0:T(2,128)}', space=vmem, size = 0x400, scoped, tag = 'scratch operand']
  %s0 = inlined_call_operand.hbm [shape: f32[2,128], index: 0, kind: input, shape index: {}]
  %s1 = inlined_call_operand.vmem [shape: f32[2,128], index: 1, kind: input, shape index: {}]
  %s2 = inlined_call_operand.vmem [shape: f32[2,128], index: 2, kind: input, shape index: {}]
  %s3 = inlined_call_operand.vmem [shape: f32[2,128], index: 3, kind: input, shape index: {}]
  %s4 = inlined_call_operand.vmem [shape: f32[2,128], index: 4, kind: input, shape index: {}]
  %s5 = inlined_call_operand.vmem [shape: f32[2,128], index: 5, kind: input, shape index: {}]
  %s6 = inlined_call_operand.hbm [shape: f32[8,128], index: 6, kind: output, shape index: {}]
  %s7 = sld [smem:[#allocation0]]
  $region46: #{tpu_custom_call.1} parent=0
    _
  %s9 = ssub.s32 1, %s7
  %s10 = scalar_select 0, %s9, %s7
  $region1: #{tpu_custom_call.1} parent=0
    #allocation3 [shape = 'u8[1024]{0}', space=vmem, size = 0x400, scoped, tag = 'input window, operand 0, single buffered']
    #allocation4 [shape = 's32[1]{0}', space=sflag, size = 0x4, scoped, tag = 'scoped memory for tpu_custom_call.1']
    #allocation5 [shape = 's32[1]{0}', space=sflag, size = 0x4, scoped, tag = 'scoped memory for tpu_custom_call.1']
    #allocation6 [shape = 'u8[4096]{0}', space=vmem, size = 0x1000, scoped, tag = 'output window, operand 0, single buffered']
    %11 = vsyncpa [#allocation4], 0
    %12 = vsyncpa [#allocation5], 0
    // Predicated region
    $region2: #{tpu_custom_call.1} parent=1 // pred_check
      _
    $region3: #{tpu_custom_call.1} parent=1 // pred_check_branch
      %14 = sbr.rel (0) target = $region5
    $region4: #{tpu_custom_call.1} parent=1 // pred_region
      %s15 = sadd.s32 0, 0
      %p16 = scmp.lt.s32.totalorder %s15, 0
      %s17 = scalar_select %p16, %s15, 0
      %s19 = ssub.s32 32, 32
      %20 = vsyncadd [#allocation4], %s19
      %s21 = smul.addr %s17, 32
      %s22 = scalar_lea.hbm %s0, %s21
      %s24 = sshll.u32 [#allocation3], 4
      %s25 = int_to_ptr.vmem [resolvable:$true] %s24
      %27 = dma.hbm_to_vmem [thread:$0]  %s22, 32, %s25, [#allocation4]
    $region5: #{tpu_custom_call.1} parent=1 // pred_fallthru
      _
    // Predicated region
    $region6: #{tpu_custom_call.1} parent=1 // pred_check
      _
    $region7: #{tpu_custom_call.1} parent=1 // pred_check_branch
      %29 = sbr.rel (0) target = $region9
    $region8: #{tpu_custom_call.1} parent=1 // pred_region
      %s30 = sadd.s32 0, 0
      %p31 = scmp.lt.s32.totalorder %s30, 0
      %s32 = scalar_select %p31, %s30, 0
      %p33 = scmp.lt.s32.totalorder %s32, 0
      %s34 = scalar_select %p33, %s32, 0
      %s35 = smul.addr %s34, 2
      %s36 = scalar_lea.vmem %s1, %s35
      %s37 = sadd.s32 0, 0
      %p38 = scmp.lt.s32.totalorder %s37, 0
      %s39 = scalar_select %p38, %s37, 0
    $region9: #{tpu_custom_call.1} parent=1 // pred_fallthru
      _
    // Predicated region
    $region10: #{tpu_custom_call.1} parent=1 // pred_check
      _
    $region11: #{tpu_custom_call.1} parent=1 // pred_check_branch
      %41 = sbr.rel (0) target = $region13
    $region12: #{tpu_custom_call.1} parent=1 // pred_region
      %s42 = sadd.s32 0, 0
      %p43 = scmp.lt.s32.totalorder %s42, 0
      %s44 = scalar_select %p43, %s42, 0
      %p45 = scmp.lt.s32.totalorder %s44, 0
      %s46 = scalar_select %p45, %s44, 0
      %s47 = smul.addr %s46, 2
      %s48 = scalar_lea.vmem %s2, %s47
      %s49 = sadd.s32 0, 0
      %p50 = scmp.lt.s32.totalorder %s49, 0
      %s51 = scalar_select %p50, %s49, 0
    $region13: #{tpu_custom_call.1} parent=1 // pred_fallthru
      _
    // Predicated region
    $region14: #{tpu_custom_call.1} parent=1 // pred_check
      _
    $region15: #{tpu_custom_call.1} parent=1 // pred_check_branch
      %53 = sbr.rel (0) target = $region17
    $region16: #{tpu_custom_call.1} parent=1 // pred_region
      %s54 = sadd.s32 0, 0
      %p55 = scmp.lt.s32.totalorder %s54, 0
      %s56 = scalar_select %p55, %s54, 0
      %p57 = scmp.lt.s32.totalorder %s56, 0
      %s58 = scalar_select %p57, %s56, 0
      %s59 = smul.addr %s58, 2
      %s60 = scalar_lea.vmem %s3, %s59
      %s61 = sadd.s32 0, 0
      %p62 = scmp.lt.s32.totalorder %s61, 0
      %s63 = scalar_select %p62, %s61, 0
    $region17: #{tpu_custom_call.1} parent=1 // pred_fallthru
      _
    // Predicated region
    $region18: #{tpu_custom_call.1} parent=1 // pred_check
      _
    $region19: #{tpu_custom_call.1} parent=1 // pred_check_branch
      %65 = sbr.rel (0) target = $region21
    $region20: #{tpu_custom_call.1} parent=1 // pred_region
      %s66 = sadd.s32 0, 0
      %p67 = scmp.lt.s32.totalorder %s66, 0
      %s68 = scalar_select %p67, %s66, 0
      %p69 = scmp.lt.s32.totalorder %s68, 0
      %s70 = scalar_select %p69, %s68, 0
      %s71 = smul.addr %s70, 2
      %s72 = scalar_lea.vmem %s4, %s71
      %s73 = sadd.s32 0, 0
      %p74 = scmp.lt.s32.totalorder %s73, 0
      %s75 = scalar_select %p74, %s73, 0
    $region21: #{tpu_custom_call.1} parent=1 // pred_fallthru
      _
    // Predicated region
    $region22: #{tpu_custom_call.1} parent=1 // pred_check
      _
    $region23: #{tpu_custom_call.1} parent=1 // pred_check_branch
      %77 = sbr.rel (0) target = $region25
    $region24: #{tpu_custom_call.1} parent=1 // pred_region
      %s78 = sadd.s32 0, 0
      %p79 = scmp.lt.s32.totalorder %s78, 0
      %s80 = scalar_select %p79, %s78, 0
      %p81 = scmp.lt.s32.totalorder %s80, 0
      %s82 = scalar_select %p81, %s80, 0
      %s83 = smul.addr %s82, 2
      %s84 = scalar_lea.vmem %s5, %s83
      %s85 = sadd.s32 0, 0
      %p86 = scmp.lt.s32.totalorder %s85, 0
      %s87 = scalar_select %p86, %s85, 0
    $region25: #{tpu_custom_call.1} parent=1 // pred_fallthru
      _
    // Predicated region
    $region26: #{tpu_custom_call.1} parent=1 // pred_check
      _
    $region27: #{tpu_custom_call.1} parent=1 // pred_check_branch
      %89 = sbr.rel (0) target = $region29
    $region28: #{tpu_custom_call.1} parent=1 // pred_region
      %90 = dma.done [#allocation4], 32
    $region29: #{tpu_custom_call.1} parent=1 // pred_fallthru
      _
    %s91 = sadd.s32 0, 0
    %p92 = scmp.lt.s32.totalorder %s91, 0
    %s93 = scalar_select %p92, %s91, 0
    %p94 = scmp.lt.s32.totalorder %s93, 0
    %s95 = scalar_select %p94, %s93, 0
    %s96 = smul.addr %s95, 2
    %s97 = scalar_lea.vmem %s1, %s96
    %s98 = sadd.s32 0, 0
    %p99 = scmp.lt.s32.totalorder %s98, 0
    %s100 = scalar_select %p99, %s98, 0
    %p101 = scmp.lt.s32.totalorder %s100, 0
    %s102 = scalar_select %p101, %s100, 0
    %s103 = smul.addr %s102, 2
    %s104 = scalar_lea.vmem %s2, %s103
    %s105 = sadd.s32 0, 0
    %p106 = scmp.lt.s32.totalorder %s105, 0
    %s107 = scalar_select %p106, %s105, 0
    %p108 = scmp.lt.s32.totalorder %s107, 0
    %s109 = scalar_select %p108, %s107, 0
    %s110 = smul.addr %s109, 2
    %s111 = scalar_lea.vmem %s3, %s110
    %s112 = sadd.s32 0, 0
    %p113 = scmp.lt.s32.totalorder %s112, 0
    %s114 = scalar_select %p113, %s112, 0
    %p115 = scmp.lt.s32.totalorder %s114, 0
    %s116 = scalar_select %p115, %s114, 0
    %s117 = smul.addr %s116, 2
    %s118 = scalar_lea.vmem %s4, %s117
    %s119 = sadd.s32 0, 0
    %p120 = scmp.lt.s32.totalorder %s119, 0
    %s121 = scalar_select %p120, %s119, 0
    %p122 = scmp.lt.s32.totalorder %s121, 0
    %s123 = scalar_select %p122, %s121, 0
    %s124 = smul.addr %s123, 2
    %s125 = scalar_lea.vmem %s5, %s124
    %s126 = sadd.s32 0, 0
    %p127 = scmp.lt.s32.totalorder %s126, 0
    %s128 = scalar_select %p127, %s126, 0
    %s129 = sadd.s32 0, 0
    %p130 = scmp.lt.s32.totalorder %s129, 0
    %s131 = scalar_select %p130, %s129, 0
    %p132 = scmp.lt.s32.totalorder %s131, 0
    %s133 = scalar_select %p132, %s131, 0
    %s134 = smul.addr %s133, 2
    %s135 = scalar_lea.vmem %s1, %s134
    %s136 = sadd.s32 0, 0
    %p137 = scmp.lt.s32.totalorder %s136, 0
    %s138 = scalar_select %p137, %s136, 0
    %s139 = sadd.s32 0, 0
    %p140 = scmp.lt.s32.totalorder %s139, 0
    %s141 = scalar_select %p140, %s139, 0
    %p142 = scmp.lt.s32.totalorder %s141, 0
    %s143 = scalar_select %p142, %s141, 0
    %s144 = smul.addr %s143, 2
    %s145 = scalar_lea.vmem %s2, %s144
    %s146 = sadd.s32 0, 0
    %p147 = scmp.lt.s32.totalorder %s146, 0
    %s148 = scalar_select %p147, %s146, 0
    %s149 = sadd.s32 0, 0
    %p150 = scmp.lt.s32.totalorder %s149, 0
    %s151 = scalar_select %p150, %s149, 0
    %p152 = scmp.lt.s32.totalorder %s151, 0
    %s153 = scalar_select %p152, %s151, 0
    %s154 = smul.addr %s153, 2
    %s155 = scalar_lea.vmem %s3, %s154
    %s156 = sadd.s32 0, 0
    %p157 = scmp.lt.s32.totalorder %s156, 0
    %s158 = scalar_select %p157, %s156, 0
    %s159 = sadd.s32 0, 0
    %p160 = scmp.lt.s32.totalorder %s159, 0
    %s161 = scalar_select %p160, %s159, 0
    %p162 = scmp.lt.s32.totalorder %s161, 0
    %s163 = scalar_select %p162, %s161, 0
    %s164 = smul.addr %s163, 2
    %s165 = scalar_lea.vmem %s4, %s164
    %s166 = sadd.s32 0, 0
    %p167 = scmp.lt.s32.totalorder %s166, 0
    %s168 = scalar_select %p167, %s166, 0
    %s169 = sadd.s32 0, 0
    %p170 = scmp.lt.s32.totalorder %s169, 0
    %s171 = scalar_select %p170, %s169, 0
    %p172 = scmp.lt.s32.totalorder %s171, 0
    %s173 = scalar_select %p172, %s171, 0
    %s174 = smul.addr %s173, 2
    %s175 = scalar_lea.vmem %s5, %s174
    %s176 = sadd.s32 0, 0
    %p177 = scmp.lt.s32.totalorder %s176, 0
    %s178 = scalar_select %p177, %s176, 0
    %p179 = scmp.eq.s32.totalorder 0, 0
    // Predicated region
    $region30: #{tpu_custom_call.1} parent=1 // pred_check
      %p180 = pneg %p179
    $region31: #{tpu_custom_call.1} parent=1 // pred_check_branch
      %182 = sbr.rel (%p180) target = $region33
    $region32: #{tpu_custom_call.1} parent=1 // pred_region
      %183 = vst [vmem:[#allocation2] sm:$0x3] 0.0
    $region33: #{tpu_custom_call.1} parent=1 // pred_fallthru
      _
    %v184 = vld [vmem:[#allocation3] sm:$0x3]
    %v185 = vld [vmem:[%s135] sm:$0x3]
    %v186 = vld [vmem:[%s145] sm:$0x3]
    %v187 = vld [vmem:[%s155] sm:$0x3]
    %v188 = vld [vmem:[%s165] sm:$0x3]
    %v189 = vld [vmem:[%s175] sm:$0x3]
    %v190 = vlog2.pop %v189
    %v191 = vmul.f32 %v190, 0.6931472
    %v192 = vlog2.pop %v185
    %v193 = vmul.f32 %v192, 0.6931472
    %v194 = vsub.f32 %v191, %v193
    %v195 = vmul.f32 %v194, 2.0
    %v196 = vmul.f32 %v185, %v185
    %v197 = vmul.f32 %v187, %v187
    %v198 = vmul.f32 %v189, %v189
    %v199 = vrcp.pop %v197
    %v200 = vmul.f32 %v197, %v199
    %v201 = vsub.f32 2.0, %v200
    %v202 = vmul.f32 %v199, %v201
    %v203 = vrcp.pop %v198
    %v204 = vmul.f32 %v198, %v203
    %v205 = vsub.f32 2.0, %v204
    %v206 = vmul.f32 %v203, %v205
    %v207 = vsub.f32 %v184, %v186
    %v208 = vsub.f32 %v184, %v188
    %v209 = vsub.f32 %v186, %v188
    %v210 = vmul.f32 %v207, %v207
    %v211 = vadd.f32 %v196, %v210
    %v212 = vmul.f32 %v202, 0.5
    %v213 = vmul.f32 %v211, %v212
    %v214 = vadd.f32 %v195, %v213
    %v215 = vadd.f32 %v196, %v197
    %v216 = vmul.f32 %v208, %v208
    %v217 = vadd.f32 %v215, %v216
    %v218 = vmul.f32 %v209, %v209
    %v219 = vadd.f32 %v217, %v218
    %v220 = vmul.f32 %v206, 0.5
    %v221 = vmul.f32 %v219, %v220
    %v222 = vadd.f32 %v214, %v221
    %v223 = vsub.f32 %v222, 1.5
    %s224 = sadd.s32 0, 0
    %s225 = smul.u32 %s224, 2
    %v226 = vlaneseq
    %v227 = vshrl.u32 %v226, 7
    %v228 = vstv %s225
    %v229 = vadd.s32 %v228, %v227
    %vm230 = vcmp.lt.s32.totalorder %v229, 2
    %v231 = vsel %vm230, %v223, 0.0
    %v232 = vld [vmem:[#allocation2] sm:$0x3]
    %v233 = vadd.f32 %v232, %v231
    %234 = vst [vmem:[#allocation2] sm:$0x3] %v233
    // Predicated region
    $region34: #{tpu_custom_call.1} parent=1 // pred_check
      %p235 = pneg %p179
    $region35: #{tpu_custom_call.1} parent=1 // pred_check_branch
      %237 = sbr.rel (%p235) target = $region37
    $region36: #{tpu_custom_call.1} parent=1 // pred_region
      %v238 = vld [vmem:[#allocation2] sm:$0x3]
      %vm239 = vcmask 1041408
      %v240 = vsel %vm239, %v238, 0.0
      %241 = vadd.xlane.f32.xlu0 %v240
      %v242 = vpop.xlane.xlu0 %241
      %v243 = vrot.slane %v242, 4
      %v244 = vadd.f32 %v242, %v243
      %v245 = vrot.slane %v244, 2
      %v246 = vadd.f32 %v244, %v245
      %v247 = vrot.slane %v246, 1
      %v248 = vadd.f32 %v246, %v247
      %s249 = vtos %v248
      %v250 = vlaneseq
      %v251 = vand.u32 %v250, 127
      %vm252 = vcmp.eq.s32.totalorder %v227, 0
      %vm253 = vcmp.eq.s32.totalorder %v251, 0
      %vm254 = vmand %vm252, %vm253
      %v255 = vstv %s249
      %v256 = vsel %vm254, %v255, 0.0
      %257 = vst [vmem:[#allocation6] sm:$0xff] %v256
    $region37: #{tpu_custom_call.1} parent=1 // pred_fallthru
      _
    // Predicated region
    $region38: #{tpu_custom_call.1} parent=1 // pred_check
      _
    $region39: #{tpu_custom_call.1} parent=1 // pred_check_branch
      %259 = sbr.rel (0) target = $region41
    $region40: #{tpu_custom_call.1} parent=1 // pred_region
      %s261 = ssub.s32 128, 128
      %262 = vsyncadd [#allocation5], %s261
      %s264 = sshll.u32 [#allocation6], 4
      %s265 = int_to_ptr.vmem [resolvable:$true] %s264
      %267 = dma.vmem_to_hbm [thread:$0]  %s265, 128, %s6, [#allocation5]
    $region41: #{tpu_custom_call.1} parent=1 // pred_fallthru
      _
    // Predicated region
    $region42: #{tpu_custom_call.1} parent=1 // pred_check
      _
    $region43: #{tpu_custom_call.1} parent=1 // pred_check_branch
      %269 = sbr.rel (0) target = $region45
    $region44: #{tpu_custom_call.1} parent=1 // pred_region
      %270 = dma.done [#allocation5], 128
    $region45: #{tpu_custom_call.1} parent=1 // pred_fallthru
      _
    %271 = vsyncpa [#allocation4], 1
    %272 = vsyncpa [#allocation5], 1

</llo_original>
